<compile_context>
chip_gen: v5e
topology: v5e:2x2
jax: 0.10.0
libtpu: 0.0.40
codegen_flags: <defaults>
</compile_context>

<pallas_src>
import functools

import numpy as np
import jax
import jax.numpy as jnp
from jax import lax
from jax.experimental import pallas as pl
from jax.experimental.pallas import tpu as pltpu


# ----------------------------------------------------------------------------------
# helpers
# ----------------------------------------------------------------------------------
def _pick_hw_tile(hw, max_tile):
    """Largest multiple of 128 that divides `hw` and is <= max_tile, else `hw`."""
    best = hw
    t = 128
    while t <= min(hw, max_tile):
        if hw % t == 0:
            best = t
        t += 128
    return best


def _tap_masks(H, W):
    """(9, 1, H*W) float32 validity masks for the 9 taps of a 3x3 'same' conv."""
    r = np.arange(H)[:, None]
    c = np.arange(W)[None, :]
    masks = np.zeros((9, 1, H * W), np.float32)
    for kh in range(3):
        for kw in range(3):
            dh, dw = kh - 1, kw - 1
            valid = (r + dh >= 0) & (r + dh < H) & (c + dw >= 0) & (c + dw < W)
            masks[kh * 3 + kw, 0] = valid.reshape(-1).astype(np.float32)
    return jnp.asarray(masks)


def _nearest_selection_matrix(src_hw, dst_hw):
    """(HW_src, HW_dst) 0/1 matrix implementing F.interpolate(mode='nearest')."""
    Hs, Ws = src_hw
    Hd, Wd = dst_hw
    ri = (np.arange(Hd) * Hs) // Hd
    ci = (np.arange(Wd) * Ws) // Wd
    src_flat = (ri[:, None] * Ws + ci[None, :]).reshape(-1)
    sel = np.zeros((Hs * Ws, Hd * Wd), np.float32)
    sel[src_flat, np.arange(Hd * Wd)] = 1.0
    return jnp.asarray(sel)


# ----------------------------------------------------------------------------------
# Kernel 1: CBAM channel-attention scale  s[c] = 1 + sigmoid(SE(max) + SE(mean))
# ----------------------------------------------------------------------------------
def _cbam_scale_kernel(x_ref, w1t_ref, w2_ref, o_ref, max_acc, sum_acc, *, hw_total):
    k = pl.program_id(1)

    @pl.when(k == 0)
    def _init():
        max_acc[...] = jnp.full_like(max_acc, -jnp.inf)
        sum_acc[...] = jnp.zeros_like(sum_acc)

    xb = x_ref[0]                                                # (C, THW), input dtype
    max_acc[...] = jnp.maximum(
        max_acc[...], jnp.max(xb, axis=1, keepdims=True).astype(jnp.float32))
    sum_acc[...] = sum_acc[...] + jnp.sum(
        xb.astype(jnp.float32), axis=1, keepdims=True)

    @pl.when(k == pl.num_programs(1) - 1)
    def _finalize():
        w1t = w1t_ref[...].astype(jnp.float32)                   # (C, Cr)  == W1^T
        w2 = w2_ref[...].astype(jnp.float32)                     # (C, Cr)

        def se(v):                                               # v: (C, 1) f32
            h = jax.nn.relu(jnp.sum(w1t * v, axis=0, keepdims=True))   # (1, Cr)
            return jnp.sum(w2 * h, axis=1, keepdims=True)               # (C, 1)

        att = jax.nn.sigmoid(se(max_acc[...]) + se(sum_acc[...] * (1.0 / hw_total)))
        o_ref[0] = (1.0 + att).astype(o_ref.dtype)               # (C, 1)


def cbam_channel_scale(x_flat, se_w1t, se_w2):
    """x_flat: (B, C, HW) -> (B, C, 1) scale = 1 + channel attention."""
    B, C, HW = x_flat.shape
    # Small tile here so the multi-step running-max/sum path is exercised even at demo
    # shapes; use ~1024-2048 lanes for production feature maps.
    hw_tile = _pick_hw_tile(HW, 128)
    kernel = functools.partial(_cbam_scale_kernel, hw_total=HW)
    return pl.pallas_call(
        kernel,
        out_shape=jax.ShapeDtypeStruct((B, C, 1), jnp.float32),
        grid=(B, HW // hw_tile),
        in_specs=[
            pl.BlockSpec((1, C, hw_tile), lambda b, k: (b, 0, k)),
            pl.BlockSpec(se_w1t.shape, lambda b, k: (0, 0)),
            pl.BlockSpec(se_w2.shape, lambda b, k: (0, 0)),
        ],
        out_specs=pl.BlockSpec((1, C, 1), lambda b, k: (b, 0, 0)),
        scratch_shapes=[pltpu.VMEM((C, 1), jnp.float32),
                        pltpu.VMEM((C, 1), jnp.float32)],
        compiler_params=pltpu.CompilerParams(
            dimension_semantics=("parallel", "arbitrary")),
    )(x_flat, se_w1t, se_w2)


# ----------------------------------------------------------------------------------
# Kernel 2: 1x1 lateral conv with the CBAM scale folded into the weights
#           o = (W * scale) @ x + b  ==  Conv1x1(x * (1 + attention))
# ----------------------------------------------------------------------------------
def _scaled_conv1x1_kernel(x_ref, s_ref, w_ref, b_ref, o_ref):
    x = x_ref[0]                                                 # (Cin, THW)
    w_eff = w_ref[...].astype(jnp.float32) * s_ref[0].astype(jnp.float32)  # (Cout, Cin)
    acc = jnp.dot(w_eff.astype(x.dtype), x, preferred_element_type=jnp.float32)
    o_ref[0] = (acc + b_ref[...].astype(jnp.float32)).astype(o_ref.dtype)


def scaled_conv1x1(x_flat, scale_row, w, b):
    """x_flat: (B, Cin, HW); scale_row: (B, 1, Cin); w: (Cout, Cin); b: (Cout, 1)."""
    B, Cin, HW = x_flat.shape
    Cout = w.shape[0]
    hw_tile = _pick_hw_tile(HW, 2048)
    return pl.pallas_call(
        _scaled_conv1x1_kernel,
        out_shape=jax.ShapeDtypeStruct((B, Cout, HW), jnp.float32),
        grid=(B, HW // hw_tile),
        in_specs=[
            pl.BlockSpec((1, Cin, hw_tile), lambda i, k: (i, 0, k)),
            pl.BlockSpec((1, 1, Cin), lambda i, k: (i, 0, 0)),
            pl.BlockSpec((Cout, Cin), lambda i, k: (0, 0)),
            pl.BlockSpec((Cout, 1), lambda i, k: (0, 0)),
        ],
        out_specs=pl.BlockSpec((1, Cout, hw_tile), lambda i, k: (i, 0, k)),
        compiler_params=pltpu.CompilerParams(
            dimension_semantics=("parallel", "parallel")),
    )(x_flat, scale_row, w, b)


# ----------------------------------------------------------------------------------
# Kernel 3: nearest-neighbour upsample (selection matmul) + lateral add
# ----------------------------------------------------------------------------------
def _upsample_add_kernel(top_ref, lat_ref, sel_ref, o_ref):
    up = jnp.dot(top_ref[0].astype(jnp.float32), sel_ref[...],
                 preferred_element_type=jnp.float32)             # (C, HW_dst)
    o_ref[0] = (lat_ref[0].astype(jnp.float32) + up).astype(o_ref.dtype)


def upsample_add(top_flat, lateral_flat, sel):
    B, C, HW_src = top_flat.shape
    HW_dst = lateral_flat.shape[2]
    return pl.pallas_call(
        _upsample_add_kernel,
        out_shape=jax.ShapeDtypeStruct((B, C, HW_dst), jnp.float32),
        grid=(B,),
        in_specs=[
            pl.BlockSpec((1, C, HW_src), lambda i: (i, 0, 0)),
            pl.BlockSpec((1, C, HW_dst), lambda i: (i, 0, 0)),
            pl.BlockSpec((HW_src, HW_dst), lambda i: (0, 0)),
        ],
        out_specs=pl.BlockSpec((1, C, HW_dst), lambda i: (i, 0, 0)),
        compiler_params=pltpu.CompilerParams(dimension_semantics=("parallel",)),
    )(top_flat, lateral_flat, sel)


# ----------------------------------------------------------------------------------
# Kernel 4: 3x3 "same" conv on flat (C, H*W): 9 shifted MXU matmuls
# ----------------------------------------------------------------------------------
def _conv3x3_kernel(x_ref, w_ref, b_ref, m_ref, o_ref, buf_ref, *, W):
    Cin, HW = x_ref.shape[1], x_ref.shape[2]
    Cout = o_ref.shape[1]
    M = W + 1                                  # margin == max |flat tap shift|

    # Only the tiny margins need zeroing (they are never overwritten); keep this
    # unconditional so correctness does not depend on grid iteration order if the
    # batch axis is sharded across TensorCores.
    buf_ref[:, :M] = jnp.zeros((Cin, M), jnp.float32)
    buf_ref[:, M + HW:] = jnp.zeros((Cin, M), jnp.float32)
    buf_ref[:, M:M + HW] = x_ref[0].astype(jnp.float32)

    acc = jnp.zeros((Cout, HW), jnp.float32)
    for kh in range(3):
        for kw in range(3):
            t = kh * 3 + kw
            s = (kh - 1) * W + (kw - 1)        # flat shift of this tap
            # Lane-offset slice of the margin-padded slab; boundary wrap is zeroed by
            # the precomputed mask.  (pltpu.roll on the XLU is a drop-in alternative.)
            xs = buf_ref[:, M + s:M + s + HW] * m_ref[t]          # (Cin, HW)
            acc = acc + jnp.dot(w_ref[t].astype(jnp.float32), xs,
                                preferred_element_type=jnp.float32)
    o_ref[0] = (acc + b_ref[...].astype(jnp.float32)).astype(o_ref.dtype)


def conv3x3_same(x_flat, w9, b, masks, *, W):
    """x_flat: (B, Cin, HW); w9: (9, Cout, Cin); b: (Cout, 1); masks: (9, 1, HW)."""
    B, Cin, HW = x_flat.shape
    Cout = w9.shape[1]
    kernel = functools.partial(_conv3x3_kernel, W=W)
    return pl.pallas_call(
        kernel,
        out_shape=jax.ShapeDtypeStruct((B, Cout, HW), jnp.float32),
        grid=(B,),
        in_specs=[
            pl.BlockSpec((1, Cin, HW), lambda i: (i, 0, 0)),
            pl.BlockSpec((9, Cout, Cin), lambda i: (0, 0, 0)),
            pl.BlockSpec((Cout, 1), lambda i: (0, 0)),
            pl.BlockSpec((9, 1, HW), lambda i: (0, 0, 0)),
        ],
        out_specs=pl.BlockSpec((1, Cout, HW), lambda i: (i, 0, 0)),
        scratch_shapes=[pltpu.VMEM((Cin, HW + 2 * (W + 1)), jnp.float32)],
        compiler_params=pltpu.CompilerParams(dimension_semantics=("parallel",)),
    )(x_flat, w9, b, masks)


# ----------------------------------------------------------------------------------
# Full CBAM-FPN forward (mirrors the PyTorch module; extra_blocks=None)
# ----------------------------------------------------------------------------------
def cbam_fpn_forward(feats, params):
    """feats: list of (B, Ci, Hi, Wi), highest resolution first.
    Returns list of (B, out_channels, Hi, Wi) FPN outputs in the same order."""
    num_levels = len(feats)
    shapes = [tuple(f.shape[2:]) for f in feats]
    flats = [f.reshape(f.shape[0], f.shape[1], -1) for f in feats]

    def lateral(i):
        p = params[i]
        scale = cbam_channel_scale(flats[i], p["se_w1t"], p["se_w2"])   # (B, Ci, 1)
        scale_row = jnp.swapaxes(scale, 1, 2)                           # (B, 1, Ci)
        return scaled_conv1x1(flats[i], scale_row, p["inner_w"], p["inner_b"])

    results = [None] * num_levels
    last_inner = lateral(num_levels - 1)
    H, W = shapes[num_levels - 1]
    results[num_levels - 1] = conv3x3_same(
        last_inner, params[num_levels - 1]["layer_w9"],
        params[num_levels - 1]["layer_b"], _tap_masks(H, W), W=W)

    for idx in range(num_levels - 2, -1, -1):
        inner_lateral = lateral(idx)
        # TODO(synk): the nearest upsample is expressed as an (HW_src, HW_dst) 0/1
        # selection matmul (matches F.interpolate(mode='nearest') for arbitrary sizes);
        # at production feature-map sizes this would be replaced by a DMA/gather kernel.
        sel = _nearest_selection_matrix(shapes[idx + 1], shapes[idx])
        last_inner = upsample_add(last_inner, inner_lateral, sel)
        H, W = shapes[idx]
        results[idx] = conv3x3_same(
            last_inner, params[idx]["layer_w9"], params[idx]["layer_b"],
            _tap_masks(H, W), W=W)

    return [r.reshape(r.shape[0], r.shape[1], h, w)
            for r, (h, w) in zip(results, shapes)]


# ----------------------------------------------------------------------------------
# Pure-JAX reference (replicates the PyTorch forward)
# ----------------------------------------------------------------------------------
def _reference_forward(feats, params):
    def channel_attention_block(x, w1, w2):
        mx = jnp.max(x, axis=(2, 3))
        av = jnp.mean(x, axis=(2, 3))

        def se(v):
            return jax.nn.relu(v @ w1.T) @ w2.T

        att = jax.nn.sigmoid(se(mx) + se(av))
        return x * att[:, :, None, None] + x

    def conv(x, w, bias, pad):
        out = lax.conv_general_dilated(
            x, w, window_strides=(1, 1), padding=[(pad, pad), (pad, pad)],
            dimension_numbers=("NCHW", "OIHW", "NCHW"))
        return out + bias.reshape(1, -1, 1, 1)

    def nearest(x, size):
        Hs, Ws = x.shape[2:]
        Hd, Wd = size
        ri = (jnp.arange(Hd) * Hs) // Hd
        ci = (jnp.arange(Wd) * Ws) // Wd
        return x[:, :, ri][:, :, :, ci]

    num_levels = len(feats)

    def lateral(i):
        p = params[i]
        a = channel_attention_block(feats[i], p["se_w1"], p["se_w2"])
        return conv(a, p["inner_w4"], p["inner_b_vec"], 0)

    results = [None] * num_levels
    last_inner = lateral(num_levels - 1)
    results[num_levels - 1] = conv(last_inner, params[num_levels - 1]["layer_w4"],
                                   params[num_levels - 1]["layer_b_vec"], 1)
    for idx in range(num_levels - 2, -1, -1):
        inner_lateral = lateral(idx)
        last_inner = inner_lateral + nearest(last_inner, inner_lateral.shape[2:])
        results[idx] = conv(last_inner, params[idx]["layer_w4"],
                            params[idx]["layer_b_vec"], 1)
    return results


if __name__ == "__main__":
    key = jax.random.PRNGKey(0)
    keys = iter(jax.random.split(key, 32))

    B = 2
    out_channels = 8
    reduction = 16
    in_channels_list = [32, 64]            # feature maps in increasing depth order
    spatial = [(16, 16), (8, 8)]

    feats = [jax.random.normal(next(keys), (B, C, H, W), jnp.float32)
             for C, (H, W) in zip(in_channels_list, spatial)]

    def uniform(k, shape, fan_in):
        bound = 1.0 / np.sqrt(fan_in)
        return jax.random.uniform(k, shape, jnp.float32, -bound, bound)

    params = []
    for C in in_channels_list:
        Cr = max(C // reduction, 1)
        se_w1 = uniform(next(keys), (Cr, C), C)                 # Conv2d(C, Cr, 1, bias=False)
        se_w2 = uniform(next(keys), (C, Cr), Cr)                # Conv2d(Cr, C, 1, bias=False)
        inner_w = uniform(next(keys), (out_channels, C), C)     # Conv2d(C, out, 1)
        inner_b = uniform(next(keys), (out_channels,), C)
        layer_w = uniform(next(keys), (out_channels, out_channels, 3, 3), out_channels * 9)
        layer_b = uniform(next(keys), (out_channels,), out_channels * 9)
        params.append(dict(
            # kernel-side layouts
            se_w1t=se_w1.T, se_w2=se_w2,
            inner_w=inner_w, inner_b=inner_b.reshape(out_channels, 1),
            layer_w9=jnp.transpose(layer_w, (2, 3, 0, 1)).reshape(9, out_channels, out_channels),
            layer_b=layer_b.reshape(out_channels, 1),
            # reference-side layouts
            se_w1=se_w1,
            inner_w4=inner_w.reshape(out_channels, C, 1, 1), inner_b_vec=inner_b,
            layer_w4=layer_w, layer_b_vec=layer_b,
        ))

    outs = jax.block_until_ready(cbam_fpn_forward(feats, params))
    refs = _reference_forward(feats, params)

    for lvl, (o, r, (H, W)) in enumerate(zip(outs, refs, spatial)):
        assert o.shape == (B, out_channels, H, W), (lvl, o.shape)
        err = float(jnp.max(jnp.abs(o - r)))
        assert err < 1e-4, (lvl, err)

    print("KERNEL_OK")
</pallas_src>

<mosaic_0001>
module attributes {stable_mosaic.version = 11 : i64} {
  func.func @_cbam_scale_kernel(%arg0: i32, %arg1: i32, %arg2: memref<1x64x64xf32, #tpu.memory_space<vmem>>, %arg3: memref<64x4xf32, #tpu.memory_space<vmem>>, %arg4: memref<64x4xf32, #tpu.memory_space<vmem>>, %arg5: memref<1x64x1xf32, #tpu.memory_space<vmem>>, %arg6: memref<64x1xf32, #tpu.memory_space<vmem>>, %arg7: memref<64x1xf32, #tpu.memory_space<vmem>>) attributes {dimension_semantics = [#tpu.dimension_semantics<parallel>, #tpu.dimension_semantics<arbitrary>], iteration_bounds = array<i64: 2, 1>, scalar_prefetch = 0 : i64, scratch_operands = 2 : i64, tpu.core_type = #tpu.core_type<tc>, window_params = [{transform_indices = @transform_0, window_bounds = array<i64: 1, 64, 64>}, {pipeline_mode = #tpu.pipeline_mode<synchronous>, transform_indices = @transform_1, window_bounds = array<i64: 64, 4>}, {pipeline_mode = #tpu.pipeline_mode<synchronous>, transform_indices = @transform_2, window_bounds = array<i64: 64, 4>}, {transform_indices = @transform_3, window_bounds = array<i64: 1, 64, 1>}]} {
    %c0_i32 = arith.constant 0 : i32
    %0 = arith.cmpi eq, %arg1, %c0_i32 : i32
    %1 = arith.extui %0 : i1 to i32
    %c0_i32_0 = arith.constant 0 : i32
    %2 = arith.cmpi ne, %1, %c0_i32_0 : i32
    scf.if %2 {
      %cst_14 = arith.constant 0xFF800000 : f32
      %18 = vector.broadcast %cst_14 : f32 to vector<64x1xf32>
      %c0_15 = arith.constant 0 : index
      %c0_16 = arith.constant 0 : index
      %19 = vector.load %arg6[%c0_15, %c0_16] : memref<64x1xf32, #tpu.memory_space<vmem>>, vector<64x1xf32>
      tpu.vector_store %arg6[%c0_15, %c0_16], %18 {strides = array<i32>} : memref<64x1xf32, #tpu.memory_space<vmem>>, vector<64x1xf32>,
      %cst_17 = arith.constant 0.000000e+00 : f32
      %20 = vector.broadcast %cst_17 : f32 to vector<64x1xf32>
      %c0_18 = arith.constant 0 : index
      %c0_19 = arith.constant 0 : index
      %21 = vector.load %arg7[%c0_18, %c0_19] : memref<64x1xf32, #tpu.memory_space<vmem>>, vector<64x1xf32>
      tpu.vector_store %arg7[%c0_18, %c0_19], %20 {strides = array<i32>} : memref<64x1xf32, #tpu.memory_space<vmem>>, vector<64x1xf32>,
    } else {
    }
    %c0 = arith.constant 0 : index
    %c0_1 = arith.constant 0 : index
    %c0_2 = arith.constant 0 : index
    %3 = vector.load %arg2[%c0, %c0_1, %c0_2] : memref<1x64x64xf32, #tpu.memory_space<vmem>>, vector<1x64x64xf32>
    %4 = vector.shape_cast %3 : vector<1x64x64xf32> to vector<64x64xf32>
    %c0_3 = arith.constant 0 : index
    %c0_4 = arith.constant 0 : index
    %5 = vector.load %arg6[%c0_3, %c0_4] : memref<64x1xf32, #tpu.memory_space<vmem>>, vector<64x1xf32>
    %cst = arith.constant dense<0xFF800000> : vector<64xf32>
    %6 = vector.multi_reduction <maximumf>, %4, %cst [1] : vector<64x64xf32> to vector<64xf32>
    %7 = vector.shape_cast %6 : vector<64xf32> to vector<64x1xf32>
    %8 = arith.maximumf %5, %7 : vector<64x1xf32>
    %c0_5 = arith.constant 0 : index
    %c0_6 = arith.constant 0 : index
    %9 = vector.load %arg6[%c0_5, %c0_6] : memref<64x1xf32, #tpu.memory_space<vmem>>, vector<64x1xf32>
    tpu.vector_store %arg6[%c0_5, %c0_6], %8 {strides = array<i32>} : memref<64x1xf32, #tpu.memory_space<vmem>>, vector<64x1xf32>,
    %c0_7 = arith.constant 0 : index
    %c0_8 = arith.constant 0 : index
    %10 = vector.load %arg7[%c0_7, %c0_8] : memref<64x1xf32, #tpu.memory_space<vmem>>, vector<64x1xf32>
    %cst_9 = arith.constant dense<0.000000e+00> : vector<64xf32>
    %11 = vector.multi_reduction <add>, %4, %cst_9 [1] : vector<64x64xf32> to vector<64xf32>
    %12 = vector.shape_cast %11 : vector<64xf32> to vector<64x1xf32>
    %13 = arith.addf %10, %12 : vector<64x1xf32>
    %c0_10 = arith.constant 0 : index
    %c0_11 = arith.constant 0 : index
    %14 = vector.load %arg7[%c0_10, %c0_11] : memref<64x1xf32, #tpu.memory_space<vmem>>, vector<64x1xf32>
    tpu.vector_store %arg7[%c0_10, %c0_11], %13 {strides = array<i32>} : memref<64x1xf32, #tpu.memory_space<vmem>>, vector<64x1xf32>,
    %c0_i32_12 = arith.constant 0 : i32
    %15 = arith.cmpi eq, %arg1, %c0_i32_12 : i32
    %16 = arith.extui %15 : i1 to i32
    %c0_i32_13 = arith.constant 0 : i32
    %17 = arith.cmpi ne, %16, %c0_i32_13 : i32
    scf.if %17 {
      %c0_14 = arith.constant 0 : index
      %c0_15 = arith.constant 0 : index
      %18 = vector.load %arg3[%c0_14, %c0_15] : memref<64x4xf32, #tpu.memory_space<vmem>>, vector<64x4xf32>
      %c0_16 = arith.constant 0 : index
      %c0_17 = arith.constant 0 : index
      %19 = vector.load %arg4[%c0_16, %c0_17] : memref<64x4xf32, #tpu.memory_space<vmem>>, vector<64x4xf32>
      %c0_18 = arith.constant 0 : index
      %c0_19 = arith.constant 0 : index
      %20 = vector.load %arg6[%c0_18, %c0_19] : memref<64x1xf32, #tpu.memory_space<vmem>>, vector<64x1xf32>
      %21 = vector.broadcast %20 : vector<64x1xf32> to vector<64x4xf32>
      %22 = arith.mulf %18, %21 : vector<64x4xf32>
      %cst_20 = arith.constant dense<0.000000e+00> : vector<4xf32>
      %23 = vector.multi_reduction <add>, %22, %cst_20 [0] : vector<64x4xf32> to vector<4xf32>
      %24 = vector.shape_cast %23 : vector<4xf32> to vector<1x4xf32>
      %cst_21 = arith.constant 0.000000e+00 : f32
      %25 = vector.broadcast %cst_21 : f32 to vector<1x4xf32>
      %26 = arith.maximumf %24, %25 : vector<1x4xf32>
      %27 = vector.broadcast %26 : vector<1x4xf32> to vector<64x4xf32>
      %28 = arith.mulf %19, %27 : vector<64x4xf32>
      %cst_22 = arith.constant dense<0.000000e+00> : vector<64xf32>
      %29 = vector.multi_reduction <add>, %28, %cst_22 [1] : vector<64x4xf32> to vector<64xf32>
      %30 = vector.shape_cast %29 : vector<64xf32> to vector<64x1xf32>
      %c0_23 = arith.constant 0 : index
      %c0_24 = arith.constant 0 : index
      %31 = vector.load %arg7[%c0_23, %c0_24] : memref<64x1xf32, #tpu.memory_space<vmem>>, vector<64x1xf32>
      %cst_25 = arith.constant 1.562500e-02 : f32
      %32 = vector.broadcast %cst_25 : f32 to vector<64x1xf32>
      %33 = arith.mulf %31, %32 : vector<64x1xf32>
      %34 = vector.broadcast %33 : vector<64x1xf32> to vector<64x4xf32>
      %35 = arith.mulf %18, %34 : vector<64x4xf32>
      %cst_26 = arith.constant dense<0.000000e+00> : vector<4xf32>
      %36 = vector.multi_reduction <add>, %35, %cst_26 [0] : vector<64x4xf32> to vector<4xf32>
      %37 = vector.shape_cast %36 : vector<4xf32> to vector<1x4xf32>
      %cst_27 = arith.constant 0.000000e+00 : f32
      %38 = vector.broadcast %cst_27 : f32 to vector<1x4xf32>
      %39 = arith.maximumf %37, %38 : vector<1x4xf32>
      %40 = vector.broadcast %39 : vector<1x4xf32> to vector<64x4xf32>
      %41 = arith.mulf %19, %40 : vector<64x4xf32>
      %cst_28 = arith.constant dense<0.000000e+00> : vector<64xf32>
      %42 = vector.multi_reduction <add>, %41, %cst_28 [1] : vector<64x4xf32> to vector<64xf32>
      %43 = vector.shape_cast %42 : vector<64xf32> to vector<64x1xf32>
      %44 = arith.addf %30, %43 : vector<64x1xf32>
      %45 = arith.negf %44 : vector<64x1xf32>
      %46 = math.exp %45 : vector<64x1xf32>
      %cst_29 = arith.constant 1.000000e+00 : f32
      %47 = vector.broadcast %cst_29 : f32 to vector<64x1xf32>
      %48 = arith.addf %47, %46 : vector<64x1xf32>
      %49 = arith.divf %47, %48 : vector<64x1xf32>
      %cst_30 = arith.constant 1.000000e+00 : f32
      %50 = vector.broadcast %cst_30 : f32 to vector<64x1xf32>
      %51 = arith.addf %50, %49 : vector<64x1xf32>
      %c0_31 = arith.constant 0 : index
      %c0_32 = arith.constant 0 : index
      %c0_33 = arith.constant 0 : index
      %52 = vector.load %arg5[%c0_31, %c0_32, %c0_33] : memref<1x64x1xf32, #tpu.memory_space<vmem>>, vector<1x64x1xf32>
      %53 = vector.shape_cast %52 : vector<1x64x1xf32> to vector<64x1xf32>
      %54 = vector.shape_cast %51 : vector<64x1xf32> to vector<1x64x1xf32>
      tpu.vector_store %arg5[%c0_31, %c0_32, %c0_33], %54 {strides = array<i32>} : memref<1x64x1xf32, #tpu.memory_space<vmem>>, vector<1x64x1xf32>,
    } else {
    }
    return
  }
  func.func @transform_0(%arg0: i32, %arg1: i32) -> (i32, i32, i32) {
    %c0_i32 = arith.constant 0 : i32
    %c0_i32_0 = arith.constant 0 : i32
    return %arg0, %c0_i32, %arg1 : i32, i32, i32
  }
  func.func @transform_1(%arg0: i32, %arg1: i32) -> (i32, i32) {
    %c0_i32 = arith.constant 0 : i32
    %c0_i32_0 = arith.constant 0 : i32
    %c0_i32_1 = arith.constant 0 : i32
    return %c0_i32, %c0_i32_0 : i32, i32
  }
  func.func @transform_2(%arg0: i32, %arg1: i32) -> (i32, i32) {
    %c0_i32 = arith.constant 0 : i32
    %c0_i32_0 = arith.constant 0 : i32
    %c0_i32_1 = arith.constant 0 : i32
    return %c0_i32, %c0_i32_0 : i32, i32
  }
  func.func @transform_3(%arg0: i32, %arg1: i32) -> (i32, i32, i32) {
    %c0_i32 = arith.constant 0 : i32
    %c0_i32_0 = arith.constant 0 : i32
    %c0_i32_1 = arith.constant 0 : i32
    return %arg0, %c0_i32, %c0_i32_0 : i32, i32, i32
  }
}

</mosaic_0001>

<llo_original>
// kernel: tpu_custom_call.1
$region0: #{tpu_custom_call.1}
  #allocation0 [shape = 'u32[]', space=smem, size = 0x4, offset = 0x4, fixed_abs, tag = 'smem constant byte address 0x4 - core index']
  #allocation1 [shape = 'u32[72,128]{1,0:T(1,128)}', space=vmem, size = 0x9000, scoped, tag = 'internal scratch']
  #allocation2 [shape = 'f32[64,1]{1,0:T(8,128)}', space=vmem, size = 0x8000, scoped, tag = 'scratch operand']
  #allocation3 [shape = 'f32[64,1]{1,0:T(8,128)}', space=vmem, size = 0x8000, scoped, tag = 'scratch operand']
  %s0 = inlined_call_operand.vmem [shape: f32[2,64,64], index: 0, kind: input, shape index: {}]
  %s1 = inlined_call_operand.vmem [shape: f32[64,4], index: 1, kind: input, shape index: {}]
  %s2 = inlined_call_operand.vmem [shape: f32[64,4], index: 2, kind: input, shape index: {}]
  %s3 = inlined_call_operand.vmem [shape: f32[2,64,1], index: 3, kind: output, shape index: {}]
  %s4 = sld [smem:[#allocation0]]
  $region53: #{tpu_custom_call.1} parent=0
    _
  %s6 = ssub.s32 1, %s4
  %s7 = scalar_select 0, %s6, %s4
  loop: start=0, step=1, limit=4
  $region2: #{tpu_custom_call.1} parent=0 // loop_pre_header
    _
  $region3: #{tpu_custom_call.1} parent=0 // loop_header
    %s9 = sphi 0, %s13
    %p10 = scmp.ge.s32.totalorder %s9, 4
    %s16 = sphi 0, %s28
    %s17 = sphi 0, %s24
    %s18 = sphi 0, %s16
    %s19 = sphi 0, %s17
    %s20 = sphi 0, %s18
    %s21 = sphi 0, %s19
    %s33 = sphi 0, %s35
    %s36 = sphi 0, %s33
    %s37 = sphi 0, %s36
    %s53 = sphi 0, %s37
    %s57 = sphi 0, %s57
    %s59 = sphi 0, %s57
    %s60 = sphi 0, %s59
    %s74 = sphi 0, %s60
    %s78 = sphi 0, %s78
    %s80 = sphi 0, %s78
    %s81 = sphi 0, %s80
    %s95 = sphi 0, %s81
    %s101 = sphi 0, %s103
    %s104 = sphi 0, %s101
    %s105 = sphi 0, %s104
    %s121 = sphi 0, %s105
  $region4: #{tpu_custom_call.1} parent=0 // loop_header_branch
    %12 = sbr.rel (%p10) target = $region8
  $region5: #{tpu_custom_call.1} parent=0 // loop_body
    %s14 = ssub.s32 %s9, 1
    %s15 = ssub.s32 %s9, 2
    %s22 = sadd.s32 1, %s17
    %p23 = scmp.ge.s32.totalorder %s22, 1
    %s24 = scalar_select %p23, 0, %s22
    %s25 = sadd.s32 1, %s16
    %s26 = scalar_select %p23, %s25, %s16
    %p27 = scmp.ge.s32.totalorder %s26, 2
    %s28 = scalar_select %p27, 0, %s26
    %s29 = ssub.s32 %s16, %s28
    %s30 = ssub.s32 %s17, %s24
    %s31 = sor.u32 %s29, %s30
    %p32 = scmp.eq.s32.totalorder %s31, 0
    %s34 = sadd.s32 %s33, 1
    %s35 = scalar_select %p32, %s33, %s34
    %p38 = pneg %p32
    %p39 = scmp.eq.s32.totalorder %s9, 1
    %p40 = por %p38, %p39
    %p41 = scmp.ne.s32.totalorder %s33, %s36
    %p42 = scmp.eq.s32.totalorder %s9, 0
    %p43 = por %p41, %p42
    %p44 = scmp.ne.s32.totalorder %s33, %s36
    %p45 = scmp.eq.s32.totalorder %s14, 1
    %p46 = por %p44, %p45
    %p47 = scmp.ne.s32.totalorder %s36, %s37
    %p48 = scmp.eq.s32.totalorder %s14, 0
    %p49 = por %p47, %p48
    %p50 = scmp.ne.s32.totalorder %s36, %s37
    %p51 = scmp.eq.s32.totalorder %s15, 1
    %p52 = por %p50, %p51
    %p54 = scmp.ne.s32.totalorder %s37, %s53
    %p55 = scmp.eq.s32.totalorder %s15, 0
    %p56 = por %p54, %p55
    %s58 = sadd.s32 %s57, 1
    %p61 = scmp.eq.s32.totalorder %s9, 1
    %p62 = scmp.ne.s32.totalorder %s57, %s59
    %p63 = scmp.eq.s32.totalorder %s9, 0
    %p64 = por %p62, %p63
    %p65 = scmp.ne.s32.totalorder %s57, %s59
    %p66 = scmp.eq.s32.totalorder %s14, 1
    %p67 = por %p65, %p66
    %p68 = scmp.ne.s32.totalorder %s59, %s60
    %p69 = scmp.eq.s32.totalorder %s14, 0
    %p70 = por %p68, %p69
    %p71 = scmp.ne.s32.totalorder %s59, %s60
    %p72 = scmp.eq.s32.totalorder %s15, 1
    %p73 = por %p71, %p72
    %p75 = scmp.ne.s32.totalorder %s60, %s74
    %p76 = scmp.eq.s32.totalorder %s15, 0
    %p77 = por %p75, %p76
    %s79 = sadd.s32 %s78, 1
    %p82 = scmp.eq.s32.totalorder %s9, 1
    %p83 = scmp.ne.s32.totalorder %s78, %s80
    %p84 = scmp.eq.s32.totalorder %s9, 0
    %p85 = por %p83, %p84
    %p86 = scmp.ne.s32.totalorder %s78, %s80
    %p87 = scmp.eq.s32.totalorder %s14, 1
    %p88 = por %p86, %p87
    %p89 = scmp.ne.s32.totalorder %s80, %s81
    %p90 = scmp.eq.s32.totalorder %s14, 0
    %p91 = por %p89, %p90
    %p92 = scmp.ne.s32.totalorder %s80, %s81
    %p93 = scmp.eq.s32.totalorder %s15, 1
    %p94 = por %p92, %p93
    %p96 = scmp.ne.s32.totalorder %s81, %s95
    %p97 = scmp.eq.s32.totalorder %s15, 0
    %p98 = por %p96, %p97
    %s99 = ssub.s32 %s16, %s28
    %p100 = scmp.eq.s32.totalorder %s99, 0
    %s102 = sadd.s32 %s101, 1
    %s103 = scalar_select %p100, %s101, %s102
    %p106 = pneg %p100
    %p107 = scmp.eq.s32.totalorder %s9, 1
    %p108 = por %p106, %p107
    %p109 = scmp.ne.s32.totalorder %s101, %s104
    %p110 = scmp.eq.s32.totalorder %s9, 0
    %p111 = por %p109, %p110
    %p112 = scmp.ne.s32.totalorder %s101, %s104
    %p113 = scmp.eq.s32.totalorder %s14, 1
    %p114 = por %p112, %p113
    %p115 = scmp.ne.s32.totalorder %s104, %s105
    %p116 = scmp.eq.s32.totalorder %s14, 0
    %p117 = por %p115, %p116
    %p118 = scmp.ne.s32.totalorder %s104, %s105
    %p119 = scmp.eq.s32.totalorder %s15, 1
    %p120 = por %p118, %p119
    %p122 = scmp.ne.s32.totalorder %s105, %s121
    %p123 = scmp.eq.s32.totalorder %s15, 0
    %p124 = por %p122, %p123
    %p125 = scmp.le.s32.totalorder 1, %s9
    %p126 = scmp.lt.s32.totalorder %s9, 3
    %p127 = pnand %p125, %p126
    %p128 = pneg %p127
    // Predicated region
    $region9: #{tpu_custom_call.1} parent=5 // pred_check
      _
    $region10: #{tpu_custom_call.1} parent=5 // pred_check_branch
      %130 = sbr.rel (%p127) target = $region12
    $region11: #{tpu_custom_call.1} parent=5 // pred_region
      %s131 = ssub.s32 %s9, 1
      // Predicated region
      $region13: #{tpu_custom_call.1} parent=11 // pred_check
        %p132 = pneg %p70
      $region14: #{tpu_custom_call.1} parent=11 // pred_check_branch
        %134 = sbr.rel (%p132) target = $region16
      $region15: #{tpu_custom_call.1} parent=11 // pred_region
        _
      $region16: #{tpu_custom_call.1} parent=11 // pred_fallthru
        _
      // Predicated region
      $region17: #{tpu_custom_call.1} parent=11 // pred_check
        %p135 = pneg %p91
      $region18: #{tpu_custom_call.1} parent=11 // pred_check_branch
        %137 = sbr.rel (%p135) target = $region20
      $region19: #{tpu_custom_call.1} parent=11 // pred_region
        _
      $region20: #{tpu_custom_call.1} parent=11 // pred_fallthru
        _
    $region12: #{tpu_custom_call.1} parent=5 // pred_fallthru
      _
    %p138 = scmp.lt.s32.totalorder %s9, 2
    // Predicated region
    $region21: #{tpu_custom_call.1} parent=5 // pred_check
      %p139 = pneg %p138
    $region22: #{tpu_custom_call.1} parent=5 // pred_check_branch
      %141 = sbr.rel (%p139) target = $region24
    $region23: #{tpu_custom_call.1} parent=5 // pred_region
      // Predicated region
      $region25: #{tpu_custom_call.1} parent=23 // pred_check
        %p142 = pneg %p43
      $region26: #{tpu_custom_call.1} parent=23 // pred_check_branch
        %144 = sbr.rel (%p142) target = $region28
      $region27: #{tpu_custom_call.1} parent=23 // pred_region
        %p145 = scmp.lt.s32.totalorder %s16, 1
        %s146 = scalar_select %p145, %s16, 1
        %p147 = scmp.lt.s32.totalorder %s17, 0
        %s148 = scalar_select %p147, %s17, 0
        %s149 = smul.addr %s146, 8
        %s150 = sadd.s32 %s148, %s149
        %s151 = smul.addr %s150, 8
        %s152 = scalar_lea.vmem %s0, %s151
      $region28: #{tpu_custom_call.1} parent=23 // pred_fallthru
        _
    $region24: #{tpu_custom_call.1} parent=5 // pred_fallthru
      _
    %p153 = scmp.le.s32.totalorder 1, %s9
    %p154 = scmp.lt.s32.totalorder %s9, 3
    %p155 = pnand %p153, %p154
    %p156 = pneg %p155
    // Predicated region
    $region29: #{tpu_custom_call.1} parent=5 // pred_check
      _
    $region30: #{tpu_custom_call.1} parent=5 // pred_check_branch
      %158 = sbr.rel (%p155) target = $region32
    $region31: #{tpu_custom_call.1} parent=5 // pred_region
      %s159 = ssub.s32 %s9, 1
      %p160 = scmp.lt.s32.totalorder %s18, 1
      %s161 = scalar_select %p160, %s18, 1
      %p162 = scmp.lt.s32.totalorder %s19, 0
      %s163 = scalar_select %p162, %s19, 0
      %s164 = smul.addr %s161, 8
      %s165 = sadd.s32 %s163, %s164
      %s166 = smul.addr %s165, 8
      %s167 = scalar_lea.vmem %s0, %s166
      %p168 = pneg %p49
      %p169 = pneg %p46
      %p170 = pneg %p70
      %p171 = pneg %p67
      %p172 = pneg %p91
      %p173 = pneg %p88
      %p174 = pneg %p117
      %p175 = pneg %p114
      %p176 = scmp.lt.s32.totalorder %s18, 1
      %s177 = scalar_select %p176, %s18, 1
      %s178 = smul.addr %s177, 8
      %s179 = smul.addr %s178, 8
      %s180 = scalar_lea.vmem %s3, %s179
      %p181 = scmp.lt.s32.totalorder %s18, 1
      %s182 = scalar_select %p181, %s18, 1
      %p183 = scmp.lt.s32.totalorder %s19, 0
      %s184 = scalar_select %p183, %s19, 0
      %s185 = smul.addr %s182, 8
      %s186 = sadd.s32 %s184, %s185
      %s187 = smul.addr %s186, 8
      %s188 = scalar_lea.vmem %s0, %s187
      %p189 = scmp.lt.s32.totalorder %s18, 1
      %s190 = scalar_select %p189, %s18, 1
      %s191 = smul.addr %s190, 8
      %s192 = smul.addr %s191, 8
      %s193 = scalar_lea.vmem %s3, %s192
      %p194 = scmp.eq.s32.totalorder %s19, 0
      // Predicated region
      $region33: #{tpu_custom_call.1} parent=31 // pred_check
        %p195 = pneg %p194
      $region34: #{tpu_custom_call.1} parent=31 // pred_check_branch
        %197 = sbr.rel (%p195) target = $region36
      $region35: #{tpu_custom_call.1} parent=31 // pred_region
        %vm198 = vcmask 7168
        %199 = vst.msk [vmem:[#allocation2] sm:$0xff] %vm198, -inf
        %200 = vst.msk [vmem:[#allocation2 + $0x8] sm:$0xff] %vm198, -inf
        %201 = vst.msk [vmem:[#allocation2 + $0x10] sm:$0xff] %vm198, -inf
        %202 = vst.msk [vmem:[#allocation2 + $0x18] sm:$0xff] %vm198, -inf
        %203 = vst.msk [vmem:[#allocation2 + $0x20] sm:$0xff] %vm198, -inf
        %204 = vst.msk [vmem:[#allocation2 + $0x28] sm:$0xff] %vm198, -inf
        %205 = vst.msk [vmem:[#allocation2 + $0x30] sm:$0xff] %vm198, -inf
        %206 = vst.msk [vmem:[#allocation2 + $0x38] sm:$0xff] %vm198, -inf
        %207 = vst.msk [vmem:[#allocation3] sm:$0xff] %vm198, 0.0
        %208 = vst.msk [vmem:[#allocation3 + $0x8] sm:$0xff] %vm198, 0.0
        %209 = vst.msk [vmem:[#allocation3 + $0x10] sm:$0xff] %vm198, 0.0
        %210 = vst.msk [vmem:[#allocation3 + $0x18] sm:$0xff] %vm198, 0.0
        %211 = vst.msk [vmem:[#allocation3 + $0x20] sm:$0xff] %vm198, 0.0
        %212 = vst.msk [vmem:[#allocation3 + $0x28] sm:$0xff] %vm198, 0.0
        %213 = vst.msk [vmem:[#allocation3 + $0x30] sm:$0xff] %vm198, 0.0
        %214 = vst.msk [vmem:[#allocation3 + $0x38] sm:$0xff] %vm198, 0.0
      $region36: #{tpu_custom_call.1} parent=31 // pred_fallthru
        _
      %v215 = vld [vmem:[%s188] sm:$0xff]
      %v216 = vld [vmem:[%s188 + $0x8] sm:$0xff]
      %v217 = vld [vmem:[%s188 + $0x10] sm:$0xff]
      %v218 = vld [vmem:[%s188 + $0x18] sm:$0xff]
      %v219 = vld [vmem:[%s188 + $0x20] sm:$0xff]
      %v220 = vld [vmem:[%s188 + $0x28] sm:$0xff]
      %v221 = vld [vmem:[%s188 + $0x30] sm:$0xff]
      %v222 = vld [vmem:[%s188 + $0x38] sm:$0xff]
      %v223 = vld [vmem:[#allocation2] sm:$0xff]
      %v224 = vld [vmem:[#allocation2 + $0x8] sm:$0xff]
      %v225 = vld [vmem:[#allocation2 + $0x10] sm:$0xff]
      %v226 = vld [vmem:[#allocation2 + $0x18] sm:$0xff]
      %v227 = vld [vmem:[#allocation2 + $0x20] sm:$0xff]
      %v228 = vld [vmem:[#allocation2 + $0x28] sm:$0xff]
      %v229 = vld [vmem:[#allocation2 + $0x30] sm:$0xff]
      %v230 = vld [vmem:[#allocation2 + $0x38] sm:$0xff]
      %vm231 = vcmask 523264
      %v232 = vsel %vm231, %v215, -inf
      %233 = vmax.xlane.f32.xlu0 %v232
      %v234 = vpop.xlane.xlu0 %233
      %v235 = vsel %vm231, %v216, -inf
      %236 = vmax.xlane.f32.xlu0 %v235
      %v237 = vpop.xlane.xlu0 %236
      %v238 = vsel %vm231, %v217, -inf
      %239 = vmax.xlane.f32.xlu0 %v238
      %v240 = vpop.xlane.xlu0 %239
      %v241 = vsel %vm231, %v218, -inf
      %242 = vmax.xlane.f32.xlu0 %v241
      %v243 = vpop.xlane.xlu0 %242
      %v244 = vsel %vm231, %v219, -inf
      %245 = vmax.xlane.f32.xlu0 %v244
      %v246 = vpop.xlane.xlu0 %245
      %v247 = vsel %vm231, %v220, -inf
      %248 = vmax.xlane.f32.xlu0 %v247
      %v249 = vpop.xlane.xlu0 %248
      %v250 = vsel %vm231, %v221, -inf
      %251 = vmax.xlane.f32.xlu0 %v250
      %v252 = vpop.xlane.xlu0 %251
      %v253 = vsel %vm231, %v222, -inf
      %254 = vmax.xlane.f32.xlu0 %v253
      %v255 = vpop.xlane.xlu0 %254
      %v256 = vmax.f32 %v223, %v234
      %v257 = vmax.f32 %v224, %v237
      %v258 = vmax.f32 %v225, %v240
      %v259 = vmax.f32 %v226, %v243
      %v260 = vmax.f32 %v227, %v246
      %v261 = vmax.f32 %v228, %v249
      %v262 = vmax.f32 %v229, %v252
      %v263 = vmax.f32 %v230, %v255
      %vm264 = vcmask 7168
      %265 = vst.msk [vmem:[#allocation2] sm:$0xff] %vm264, %v256
      %266 = vst.msk [vmem:[#allocation2 + $0x8] sm:$0xff] %vm264, %v257
      %267 = vst.msk [vmem:[#allocation2 + $0x10] sm:$0xff] %vm264, %v258
      %268 = vst.msk [vmem:[#allocation2 + $0x18] sm:$0xff] %vm264, %v259
      %269 = vst.msk [vmem:[#allocation2 + $0x20] sm:$0xff] %vm264, %v260
      %270 = vst.msk [vmem:[#allocation2 + $0x28] sm:$0xff] %vm264, %v261
      %271 = vst.msk [vmem:[#allocation2 + $0x30] sm:$0xff] %vm264, %v262
      %272 = vst.msk [vmem:[#allocation2 + $0x38] sm:$0xff] %vm264, %v263
      %v273 = vld [vmem:[#allocation3] sm:$0xff]
      %v274 = vld [vmem:[#allocation3 + $0x8] sm:$0xff]
      %v275 = vld [vmem:[#allocation3 + $0x10] sm:$0xff]
      %v276 = vld [vmem:[#allocation3 + $0x18] sm:$0xff]
      %v277 = vld [vmem:[#allocation3 + $0x20] sm:$0xff]
      %v278 = vld [vmem:[#allocation3 + $0x28] sm:$0xff]
      %v279 = vld [vmem:[#allocation3 + $0x30] sm:$0xff]
      %v280 = vld [vmem:[#allocation3 + $0x38] sm:$0xff]
      %v281 = vsel %vm231, %v215, 0.0
      %282 = vadd.xlane.f32.xlu0 %v281
      %v283 = vpop.xlane.xlu0 %282
      %v284 = vsel %vm231, %v216, 0.0
      %285 = vadd.xlane.f32.xlu0 %v284
      %v286 = vpop.xlane.xlu0 %285
      %v287 = vsel %vm231, %v217, 0.0
      %288 = vadd.xlane.f32.xlu0 %v287
      %v289 = vpop.xlane.xlu0 %288
      %v290 = vsel %vm231, %v218, 0.0
      %291 = vadd.xlane.f32.xlu0 %v290
      %v292 = vpop.xlane.xlu0 %291
      %v293 = vsel %vm231, %v219, 0.0
      %294 = vadd.xlane.f32.xlu0 %v293
      %v295 = vpop.xlane.xlu0 %294
      %v296 = vsel %vm231, %v220, 0.0
      %297 = vadd.xlane.f32.xlu0 %v296
      %v298 = vpop.xlane.xlu0 %297
      %v299 = vsel %vm231, %v221, 0.0
      %300 = vadd.xlane.f32.xlu0 %v299
      %v301 = vpop.xlane.xlu0 %300
      %v302 = vsel %vm231, %v222, 0.0
      %303 = vadd.xlane.f32.xlu0 %v302
      %v304 = vpop.xlane.xlu0 %303
      %v305 = vadd.f32 %v273, %v283
      %v306 = vadd.f32 %v274, %v286
      %v307 = vadd.f32 %v275, %v289
      %v308 = vadd.f32 %v276, %v292
      %v309 = vadd.f32 %v277, %v295
      %v310 = vadd.f32 %v278, %v298
      %v311 = vadd.f32 %v279, %v301
      %v312 = vadd.f32 %v280, %v304
      %313 = vst.msk [vmem:[#allocation3] sm:$0xff] %vm264, %v305
      %314 = vst.msk [vmem:[#allocation3 + $0x8] sm:$0xff] %vm264, %v306
      %315 = vst.msk [vmem:[#allocation3 + $0x10] sm:$0xff] %vm264, %v307
      %316 = vst.msk [vmem:[#allocation3 + $0x18] sm:$0xff] %vm264, %v308
      %317 = vst.msk [vmem:[#allocation3 + $0x20] sm:$0xff] %vm264, %v309
      %318 = vst.msk [vmem:[#allocation3 + $0x28] sm:$0xff] %vm264, %v310
      %319 = vst.msk [vmem:[#allocation3 + $0x30] sm:$0xff] %vm264, %v311
      %320 = vst.msk [vmem:[#allocation3 + $0x38] sm:$0xff] %vm264, %v312
      // Predicated region
      $region37: #{tpu_custom_call.1} parent=31 // pred_check
        %p321 = pneg %p194
      $region38: #{tpu_custom_call.1} parent=31 // pred_check_branch
        %323 = sbr.rel (%p321) target = $region40
      $region39: #{tpu_custom_call.1} parent=31 // pred_region
        %v324 = vld [vmem:[%s1] sm:$0xff]
        %v325 = vld [vmem:[%s1 + $0x8] sm:$0xff]
        %v326 = vld [vmem:[%s1 + $0x10] sm:$0xff]
        %v327 = vld [vmem:[%s1 + $0x18] sm:$0xff]
        %v328 = vld [vmem:[%s1 + $0x20] sm:$0xff]
        %v329 = vld [vmem:[%s1 + $0x28] sm:$0xff]
        %v330 = vld [vmem:[%s1 + $0x30] sm:$0xff]
        %v331 = vld [vmem:[%s1 + $0x38] sm:$0xff]
        %v332 = vld [vmem:[%s2] sm:$0xff]
        %v333 = vld [vmem:[%s2 + $0x8] sm:$0xff]
        %v334 = vld [vmem:[%s2 + $0x10] sm:$0xff]
        %v335 = vld [vmem:[%s2 + $0x18] sm:$0xff]
        %v336 = vld [vmem:[%s2 + $0x20] sm:$0xff]
        %v337 = vld [vmem:[%s2 + $0x28] sm:$0xff]
        %v338 = vld [vmem:[%s2 + $0x30] sm:$0xff]
        %v339 = vld [vmem:[%s2 + $0x38] sm:$0xff]
        %v340 = vld [vmem:[#allocation2] sm:$0xff]
        %v341 = vld [vmem:[#allocation2 + $0x8] sm:$0xff]
        %v342 = vld [vmem:[#allocation2 + $0x10] sm:$0xff]
        %v343 = vld [vmem:[#allocation2 + $0x18] sm:$0xff]
        %v344 = vld [vmem:[#allocation2 + $0x20] sm:$0xff]
        %v345 = vld [vmem:[#allocation2 + $0x28] sm:$0xff]
        %v346 = vld [vmem:[#allocation2 + $0x30] sm:$0xff]
        %v347 = vld [vmem:[#allocation2 + $0x38] sm:$0xff]
        %349 = vset.pattern.permute.xlu0 0
        %350 = vperm.xlu0 %349, %v340
        %v351 = vpop.permute.xlu0 %350
        %354 = vset.pattern.permute.xlu0 0
        %355 = vperm.xlu0 %354, %v341
        %v356 = vpop.permute.xlu0 %355
        %359 = vset.pattern.permute.xlu0 0
        %360 = vperm.xlu0 %359, %v342
        %v361 = vpop.permute.xlu0 %360
        %364 = vset.pattern.permute.xlu0 0
        %365 = vperm.xlu0 %364, %v343
        %v366 = vpop.permute.xlu0 %365
        %369 = vset.pattern.permute.xlu0 0
        %370 = vperm.xlu0 %369, %v344
        %v371 = vpop.permute.xlu0 %370
        %374 = vset.pattern.permute.xlu0 0
        %375 = vperm.xlu0 %374, %v345
        %v376 = vpop.permute.xlu0 %375
        %379 = vset.pattern.permute.xlu0 0
        %380 = vperm.xlu0 %379, %v346
        %v381 = vpop.permute.xlu0 %380
        %384 = vset.pattern.permute.xlu0 0
        %385 = vperm.xlu0 %384, %v347
        %v386 = vpop.permute.xlu0 %385
        %v388 = vmul.f32 %v324, %v351
        %v389 = vmul.f32 %v325, %v356
        %v390 = vmul.f32 %v326, %v361
        %v391 = vmul.f32 %v327, %v366
        %v392 = vmul.f32 %v328, %v371
        %v393 = vmul.f32 %v329, %v376
        %v394 = vmul.f32 %v330, %v381
        %v395 = vmul.f32 %v331, %v386
        %vm396 = vcmask 31744
        %v397 = vsel %vm396, %v388, 0.0
        %v398 = vsel %vm396, %v389, 0.0
        %v399 = vadd.f32 %v397, %v398
        %v400 = vsel %vm396, %v390, 0.0
        %v401 = vadd.f32 %v399, %v400
        %v402 = vsel %vm396, %v391, 0.0
        %v403 = vadd.f32 %v401, %v402
        %v404 = vsel %vm396, %v392, 0.0
        %v405 = vadd.f32 %v403, %v404
        %v406 = vsel %vm396, %v393, 0.0
        %v407 = vadd.f32 %v405, %v406
        %v408 = vsel %vm396, %v394, 0.0
        %v409 = vadd.f32 %v407, %v408
        %v410 = vsel %vm396, %v395, 0.0
        %v411 = vadd.f32 %v409, %v410
        %v412 = vrot.slane %v411, 4
        %v413 = vadd.f32 %v411, %v412
        %v414 = vrot.slane %v413, 2
        %v415 = vadd.f32 %v413, %v414
        %v416 = vrot.slane %v415, 1
        %v417 = vadd.f32 %v415, %v416
        %v418 = vmax.f32 %v417, 0.0
        %v419 = vmul.f32 %v332, %v418
        %v420 = vmul.f32 %v333, %v418
        %v421 = vmul.f32 %v334, %v418
        %v422 = vmul.f32 %v335, %v418
        %v423 = vmul.f32 %v336, %v418
        %v424 = vmul.f32 %v337, %v418
        %v425 = vmul.f32 %v338, %v418
        %v426 = vmul.f32 %v339, %v418
        %v427 = vsel %vm396, %v419, 0.0
        %428 = vadd.xlane.f32.xlu0 %v427
        %v429 = vpop.xlane.xlu0 %428
        %v430 = vsel %vm396, %v420, 0.0
        %431 = vadd.xlane.f32.xlu0 %v430
        %v432 = vpop.xlane.xlu0 %431
        %v433 = vsel %vm396, %v421, 0.0
        %434 = vadd.xlane.f32.xlu0 %v433
        %v435 = vpop.xlane.xlu0 %434
        %v436 = vsel %vm396, %v422, 0.0
        %437 = vadd.xlane.f32.xlu0 %v436
        %v438 = vpop.xlane.xlu0 %437
        %v439 = vsel %vm396, %v423, 0.0
        %440 = vadd.xlane.f32.xlu0 %v439
        %v441 = vpop.xlane.xlu0 %440
        %v442 = vsel %vm396, %v424, 0.0
        %443 = vadd.xlane.f32.xlu0 %v442
        %v444 = vpop.xlane.xlu0 %443
        %v445 = vsel %vm396, %v425, 0.0
        %446 = vadd.xlane.f32.xlu0 %v445
        %v447 = vpop.xlane.xlu0 %446
        %v448 = vsel %vm396, %v426, 0.0
        %449 = vadd.xlane.f32.xlu0 %v448
        %v450 = vpop.xlane.xlu0 %449
        %v451 = vld [vmem:[#allocation3] sm:$0xff]
        %v452 = vld [vmem:[#allocation3 + $0x8] sm:$0xff]
        %v453 = vld [vmem:[#allocation3 + $0x10] sm:$0xff]
        %v454 = vld [vmem:[#allocation3 + $0x18] sm:$0xff]
        %v455 = vld [vmem:[#allocation3 + $0x20] sm:$0xff]
        %v456 = vld [vmem:[#allocation3 + $0x28] sm:$0xff]
        %v457 = vld [vmem:[#allocation3 + $0x30] sm:$0xff]
        %v458 = vld [vmem:[#allocation3 + $0x38] sm:$0xff]
        %v459 = vmul.f32 %v451, 0.015625
        %v460 = vmul.f32 %v452, 0.015625
        %v461 = vmul.f32 %v453, 0.015625
        %v462 = vmul.f32 %v454, 0.015625
        %v463 = vmul.f32 %v455, 0.015625
        %v464 = vmul.f32 %v456, 0.015625
        %v465 = vmul.f32 %v457, 0.015625
        %v466 = vmul.f32 %v458, 0.015625
        %468 = vset.pattern.permute.xlu0 0
        %469 = vperm.xlu0 %468, %v459
        %v470 = vpop.permute.xlu0 %469
        %473 = vset.pattern.permute.xlu0 0
        %474 = vperm.xlu0 %473, %v460
        %v475 = vpop.permute.xlu0 %474
        %478 = vset.pattern.permute.xlu0 0
        %479 = vperm.xlu0 %478, %v461
        %v480 = vpop.permute.xlu0 %479
        %483 = vset.pattern.permute.xlu0 0
        %484 = vperm.xlu0 %483, %v462
        %v485 = vpop.permute.xlu0 %484
        %488 = vset.pattern.permute.xlu0 0
        %489 = vperm.xlu0 %488, %v463
        %v490 = vpop.permute.xlu0 %489
        %493 = vset.pattern.permute.xlu0 0
        %494 = vperm.xlu0 %493, %v464
        %v495 = vpop.permute.xlu0 %494
        %498 = vset.pattern.permute.xlu0 0
        %499 = vperm.xlu0 %498, %v465
        %v500 = vpop.permute.xlu0 %499
        %503 = vset.pattern.permute.xlu0 0
        %504 = vperm.xlu0 %503, %v466
        %v505 = vpop.permute.xlu0 %504
        %v507 = vmul.f32 %v324, %v470
        %v508 = vmul.f32 %v325, %v475
        %v509 = vmul.f32 %v326, %v480
        %v510 = vmul.f32 %v327, %v485
        %v511 = vmul.f32 %v328, %v490
        %v512 = vmul.f32 %v329, %v495
        %v513 = vmul.f32 %v330, %v500
        %v514 = vmul.f32 %v331, %v505
        %v515 = vsel %vm396, %v507, 0.0
        %v516 = vsel %vm396, %v508, 0.0
        %v517 = vadd.f32 %v515, %v516
        %v518 = vsel %vm396, %v509, 0.0
        %v519 = vadd.f32 %v517, %v518
        %v520 = vsel %vm396, %v510, 0.0
        %v521 = vadd.f32 %v519, %v520
        %v522 = vsel %vm396, %v511, 0.0
        %v523 = vadd.f32 %v521, %v522
        %v524 = vsel %vm396, %v512, 0.0
        %v525 = vadd.f32 %v523, %v524
        %v526 = vsel %vm396, %v513, 0.0
        %v527 = vadd.f32 %v525, %v526
        %v528 = vsel %vm396, %v514, 0.0
        %v529 = vadd.f32 %v527, %v528
        %v530 = vrot.slane %v529, 4
        %v531 = vadd.f32 %v529, %v530
        %v532 = vrot.slane %v531, 2
        %v533 = vadd.f32 %v531, %v532
        %v534 = vrot.slane %v533, 1
        %v535 = vadd.f32 %v533, %v534
        %v536 = vmax.f32 %v535, 0.0
        %v537 = vmul.f32 %v332, %v536
        %v538 = vmul.f32 %v333, %v536
        %v539 = vmul.f32 %v334, %v536
        %v540 = vmul.f32 %v335, %v536
        %v541 = vmul.f32 %v336, %v536
        %v542 = vmul.f32 %v337, %v536
        %v543 = vmul.f32 %v338, %v536
        %v544 = vmul.f32 %v339, %v536
        %v545 = vsel %vm396, %v537, 0.0
        %546 = vadd.xlane.f32.xlu0 %v545
        %v547 = vpop.xlane.xlu0 %546
        %v548 = vsel %vm396, %v538, 0.0
        %549 = vadd.xlane.f32.xlu0 %v548
        %v550 = vpop.xlane.xlu0 %549
        %v551 = vsel %vm396, %v539, 0.0
        %552 = vadd.xlane.f32.xlu0 %v551
        %v553 = vpop.xlane.xlu0 %552
        %v554 = vsel %vm396, %v540, 0.0
        %555 = vadd.xlane.f32.xlu0 %v554
        %v556 = vpop.xlane.xlu0 %555
        %v557 = vsel %vm396, %v541, 0.0
        %558 = vadd.xlane.f32.xlu0 %v557
        %v559 = vpop.xlane.xlu0 %558
        %v560 = vsel %vm396, %v542, 0.0
        %561 = vadd.xlane.f32.xlu0 %v560
        %v562 = vpop.xlane.xlu0 %561
        %v563 = vsel %vm396, %v543, 0.0
        %564 = vadd.xlane.f32.xlu0 %v563
        %v565 = vpop.xlane.xlu0 %564
        %v566 = vsel %vm396, %v544, 0.0
        %567 = vadd.xlane.f32.xlu0 %v566
        %v568 = vpop.xlane.xlu0 %567
        %v569 = vadd.f32 %v429, %v547
        %v570 = vadd.f32 %v432, %v550
        %v571 = vadd.f32 %v435, %v553
        %v572 = vadd.f32 %v438, %v556
        %v573 = vadd.f32 %v441, %v559
        %v574 = vadd.f32 %v444, %v562
        %v575 = vadd.f32 %v447, %v565
        %v576 = vadd.f32 %v450, %v568
        %v577 = vxor.u32 %v569, 2147483648
        %v578 = vxor.u32 %v570, 2147483648
        %v579 = vxor.u32 %v571, 2147483648
        %v580 = vxor.u32 %v572, 2147483648
        %v581 = vxor.u32 %v573, 2147483648
        %v582 = vxor.u32 %v574, 2147483648
        %v583 = vxor.u32 %v575, 2147483648
        %v584 = vxor.u32 %v576, 2147483648
        %v585 = vmul.f32 %v577, 1.442695
        %v586 = vpow.pop %v585
        %v587 = vmul.f32 %v578, 1.442695
        %v588 = vpow.pop %v587
        %v589 = vmul.f32 %v579, 1.442695
        %v590 = vpow.pop %v589
        %v591 = vmul.f32 %v580, 1.442695
        %v592 = vpow.pop %v591
        %v593 = vmul.f32 %v581, 1.442695
        %v594 = vpow.pop %v593
        %v595 = vmul.f32 %v582, 1.442695
        %v596 = vpow.pop %v595
        %v597 = vmul.f32 %v583, 1.442695
        %v598 = vpow.pop %v597
        %v599 = vmul.f32 %v584, 1.442695
        %v600 = vpow.pop %v599
        %v601 = vadd.f32 %v586, 1.0
        %v602 = vadd.f32 %v588, 1.0
        %v603 = vadd.f32 %v590, 1.0
        %v604 = vadd.f32 %v592, 1.0
        %v605 = vadd.f32 %v594, 1.0
        %v606 = vadd.f32 %v596, 1.0
        %v607 = vadd.f32 %v598, 1.0
        %v608 = vadd.f32 %v600, 1.0
        %v609 = vrcp.pop %v601
        %v610 = vmul.f32 %v601, %v609
        %v611 = vsub.f32 1.0, %v610
        %v612 = vmul.f32 %v609, %v611
        %v613 = vadd.f32 %v609, %v612
        %vm614 = vweird.f32 %v601
        %vm615 = vweird.f32 %v609
        %vm616 = vmor %vm614, %vm615
        %v617 = vsel %vm616, %v609, %v613
        %v618 = vand.u32 2147483647, %v601
        %vm619 = vcmp.eq.f32.partialorder %v618, 8.507059e+37
        %v620 = vand.u32 %v601, 2147483648
        %v621 = vor.u32 1.1754944e-38, %v620
        %v622 = vsel %vm619, %v621, %v617
        %v623 = vmul.f32 1.0, %v622
        %v624 = vrcp.pop %v602
        %v625 = vmul.f32 %v602, %v624
        %v626 = vsub.f32 1.0, %v625
        %v627 = vmul.f32 %v624, %v626
        %v628 = vadd.f32 %v624, %v627
        %vm629 = vweird.f32 %v602
        %vm630 = vweird.f32 %v624
        %vm631 = vmor %vm629, %vm630
        %v632 = vsel %vm631, %v624, %v628
        %v633 = vand.u32 2147483647, %v602
        %vm634 = vcmp.eq.f32.partialorder %v633, 8.507059e+37
        %v635 = vand.u32 %v602, 2147483648
        %v636 = vor.u32 1.1754944e-38, %v635
        %v637 = vsel %vm634, %v636, %v632
        %v638 = vmul.f32 1.0, %v637
        %v639 = vrcp.pop %v603
        %v640 = vmul.f32 %v603, %v639
        %v641 = vsub.f32 1.0, %v640
        %v642 = vmul.f32 %v639, %v641
        %v643 = vadd.f32 %v639, %v642
        %vm644 = vweird.f32 %v603
        %vm645 = vweird.f32 %v639
        %vm646 = vmor %vm644, %vm645
        %v647 = vsel %vm646, %v639, %v643
        %v648 = vand.u32 2147483647, %v603
        %vm649 = vcmp.eq.f32.partialorder %v648, 8.507059e+37
        %v650 = vand.u32 %v603, 2147483648
        %v651 = vor.u32 1.1754944e-38, %v650
        %v652 = vsel %vm649, %v651, %v647
        %v653 = vmul.f32 1.0, %v652
        %v654 = vrcp.pop %v604
        %v655 = vmul.f32 %v604, %v654
        %v656 = vsub.f32 1.0, %v655
        %v657 = vmul.f32 %v654, %v656
        %v658 = vadd.f32 %v654, %v657
        %vm659 = vweird.f32 %v604
        %vm660 = vweird.f32 %v654
        %vm661 = vmor %vm659, %vm660
        %v662 = vsel %vm661, %v654, %v658
        %v663 = vand.u32 2147483647, %v604
        %vm664 = vcmp.eq.f32.partialorder %v663, 8.507059e+37
        %v665 = vand.u32 %v604, 2147483648
        %v666 = vor.u32 1.1754944e-38, %v665
        %v667 = vsel %vm664, %v666, %v662
        %v668 = vmul.f32 1.0, %v667
        %v669 = vrcp.pop %v605
        %v670 = vmul.f32 %v605, %v669
        %v671 = vsub.f32 1.0, %v670
        %v672 = vmul.f32 %v669, %v671
        %v673 = vadd.f32 %v669, %v672
        %vm674 = vweird.f32 %v605
        %vm675 = vweird.f32 %v669
        %vm676 = vmor %vm674, %vm675
        %v677 = vsel %vm676, %v669, %v673
        %v678 = vand.u32 2147483647, %v605
        %vm679 = vcmp.eq.f32.partialorder %v678, 8.507059e+37
        %v680 = vand.u32 %v605, 2147483648
        %v681 = vor.u32 1.1754944e-38, %v680
        %v682 = vsel %vm679, %v681, %v677
        %v683 = vmul.f32 1.0, %v682
        %v684 = vrcp.pop %v606
        %v685 = vmul.f32 %v606, %v684
        %v686 = vsub.f32 1.0, %v685
        %v687 = vmul.f32 %v684, %v686
        %v688 = vadd.f32 %v684, %v687
        %vm689 = vweird.f32 %v606
        %vm690 = vweird.f32 %v684
        %vm691 = vmor %vm689, %vm690
        %v692 = vsel %vm691, %v684, %v688
        %v693 = vand.u32 2147483647, %v606
        %vm694 = vcmp.eq.f32.partialorder %v693, 8.507059e+37
        %v695 = vand.u32 %v606, 2147483648
        %v696 = vor.u32 1.1754944e-38, %v695
        %v697 = vsel %vm694, %v696, %v692
        %v698 = vmul.f32 1.0, %v697
        %v699 = vrcp.pop %v607
        %v700 = vmul.f32 %v607, %v699
        %v701 = vsub.f32 1.0, %v700
        %v702 = vmul.f32 %v699, %v701
        %v703 = vadd.f32 %v699, %v702
        %vm704 = vweird.f32 %v607
        %vm705 = vweird.f32 %v699
        %vm706 = vmor %vm704, %vm705
        %v707 = vsel %vm706, %v699, %v703
        %v708 = vand.u32 2147483647, %v607
        %vm709 = vcmp.eq.f32.partialorder %v708, 8.507059e+37
        %v710 = vand.u32 %v607, 2147483648
        %v711 = vor.u32 1.1754944e-38, %v710
        %v712 = vsel %vm709, %v711, %v707
        %v713 = vmul.f32 1.0, %v712
        %v714 = vrcp.pop %v608
        %v715 = vmul.f32 %v608, %v714
        %v716 = vsub.f32 1.0, %v715
        %v717 = vmul.f32 %v714, %v716
        %v718 = vadd.f32 %v714, %v717
        %vm719 = vweird.f32 %v608
        %vm720 = vweird.f32 %v714
        %vm721 = vmor %vm719, %vm720
        %v722 = vsel %vm721, %v714, %v718
        %v723 = vand.u32 2147483647, %v608
        %vm724 = vcmp.eq.f32.partialorder %v723, 8.507059e+37
        %v725 = vand.u32 %v608, 2147483648
        %v726 = vor.u32 1.1754944e-38, %v725
        %v727 = vsel %vm724, %v726, %v722
        %v728 = vmul.f32 1.0, %v727
        %v729 = vadd.f32 %v623, 1.0
        %v730 = vadd.f32 %v638, 1.0
        %v731 = vadd.f32 %v653, 1.0
        %v732 = vadd.f32 %v668, 1.0
        %v733 = vadd.f32 %v683, 1.0
        %v734 = vadd.f32 %v698, 1.0
        %v735 = vadd.f32 %v713, 1.0
        %v736 = vadd.f32 %v728, 1.0
        %737 = vst.msk [vmem:[%s193] sm:$0xff] %vm264, %v729
        %738 = vst.msk [vmem:[%s193 + $0x8] sm:$0xff] %vm264, %v730
        %739 = vst.msk [vmem:[%s193 + $0x10] sm:$0xff] %vm264, %v731
        %740 = vst.msk [vmem:[%s193 + $0x18] sm:$0xff] %vm264, %v732
        %741 = vst.msk [vmem:[%s193 + $0x20] sm:$0xff] %vm264, %v733
        %742 = vst.msk [vmem:[%s193 + $0x28] sm:$0xff] %vm264, %v734
        %743 = vst.msk [vmem:[%s193 + $0x30] sm:$0xff] %vm264, %v735
        %744 = vst.msk [vmem:[%s193 + $0x38] sm:$0xff] %vm264, %v736
      $region40: #{tpu_custom_call.1} parent=31 // pred_fallthru
        _
      %p745 = scmp.lt.s32.totalorder %s18, 1
      %s746 = scalar_select %p745, %s18, 1
      %s747 = smul.addr %s746, 8
      %s748 = smul.addr %s747, 8
      %s749 = scalar_lea.vmem %s3, %s748
      // Predicated region
      $region41: #{tpu_custom_call.1} parent=31 // pred_check
        %p750 = pneg %p114
      $region42: #{tpu_custom_call.1} parent=31 // pred_check_branch
        %752 = sbr.rel (%p750) target = $region44
      $region43: #{tpu_custom_call.1} parent=31 // pred_region
        _
      $region44: #{tpu_custom_call.1} parent=31 // pred_fallthru
        _
    $region32: #{tpu_custom_call.1} parent=5 // pred_fallthru
      _
    %p753 = scmp.le.s32.totalorder 2, %s9
    // Predicated region
    $region45: #{tpu_custom_call.1} parent=5 // pred_check
      %p754 = pneg %p753
    $region46: #{tpu_custom_call.1} parent=5 // pred_check_branch
      %756 = sbr.rel (%p754) target = $region48
    $region47: #{tpu_custom_call.1} parent=5 // pred_region
      %s757 = ssub.s32 %s9, 2
      // Predicated region
      $region49: #{tpu_custom_call.1} parent=47 // pred_check
        %p758 = pneg %p120
      $region50: #{tpu_custom_call.1} parent=47 // pred_check_branch
        %760 = sbr.rel (%p758) target = $region52
      $region51: #{tpu_custom_call.1} parent=47 // pred_region
        %p761 = scmp.lt.s32.totalorder %s20, 1
        %s762 = scalar_select %p761, %s20, 1
        %s763 = smul.addr %s762, 8
        %s764 = smul.addr %s763, 8
        %s765 = scalar_lea.vmem %s3, %s764
      $region52: #{tpu_custom_call.1} parent=47 // pred_fallthru
        _
    $region48: #{tpu_custom_call.1} parent=5 // pred_fallthru
      _
  $region6: #{tpu_custom_call.1} parent=0 // loop_footer
    %s13 = sadd.s32 1, %s9
  $region7: #{tpu_custom_call.1} parent=0 // loop_footer_branch
    %8 = sbr.rel target = $region3
  $region8: #{tpu_custom_call.1} parent=0 // loop_exit
    _

</llo_original>
